<compile_context>
chip_gen: v5e
topology: v5e:2x2
jax: 0.10.0
libtpu: 0.0.40
codegen_flags: <defaults>
</compile_context>

<pallas_src>
import math

import jax
import jax.numpy as jnp
from jax.experimental import pallas as pl
from jax.experimental.pallas import tpu as pltpu


LANES = 128     # vreg lane width (fast axis, last dim)
SUBLANES = 8    # f32 sublane count; the accumulator tile is (8, 128) f32


def _round_up(x: int, m: int) -> int:
    return ((x + m - 1) // m) * m


def _packed_sublanes(dtype) -> int:
    """Native packed tile height: 8 rows (4-byte), 16 (2-byte), 32 (1-byte)."""
    return SUBLANES * max(1, 4 // jnp.dtype(dtype).itemsize)


def _chip_config():
    """(block_bytes_per_input, vmem_limit_bytes, max_parallel_chunks)."""
    kind = ""
    try:
        kind = jax.devices()[0].device_kind.lower()
    except Exception:
        pass
    multi_core = ("v7" in kind) or ("7x" in kind) or ("v4" in kind)
    if multi_core:
        # 2 TensorCores / chip, ~3.2 TB/s HBM (v7x): bigger step amortizes the
        # ~0.35us per-grid-step overhead; 48 MiB scoped limit fits the
        # 2 inputs x 2 buffers x 8 MiB working set within 64 MiB/TC VMEM.
        # TODO(synk): verify on-hw that the "parallel" outer axis shards
        #             across both TensorCores; fall back to CORE_PARALLEL /
        #             core_map if the annotation is a codegen no-op.
        return 8 * 1024 * 1024, 48 * 1024 * 1024, 2
    # v5e / v6e: single TensorCore.  Explicit 32 MiB scoped limit (v5e default
    # is only 16 MiB); 4 MiB blocks keep the double-buffered set at ~16 MiB.
    return 4 * 1024 * 1024, 32 * 1024 * 1024, 1


def _make_kernel(tile_rows: int, inner: int, valid_rows: int, need_mask: bool):
    def kernel(pred_ref, tgt_ref, out_ref):
        """Accumulate sum((pred - target)^2) of this chunk into a (1,8,128) vreg.

        Grid is (parallel_chunk g, reduction step i).  The output block index
        only depends on g, so out_ref stays VMEM-resident across the inner
        axis and is used directly as the accumulator (pattern P3).
        """
        @pl.when(pl.program_id(1) == 0)
        def _init():
            out_ref[...] = jnp.zeros_like(out_ref)

        # Cast in-kernel (no-op for f32; keeps bf16/int8 HBM traffic narrow).
        diff = pred_ref[...].astype(jnp.float32) - tgt_ref[...].astype(jnp.float32)
        sq = diff * diff

        if need_mask:
            # Final block may be partial: zero rows past the true extent.
            # Pure VPU work (iota + compare + select) — free under DMA slack.
            start = (pl.program_id(0) * inner + pl.program_id(1)) * tile_rows
            row_ids = start + jax.lax.broadcasted_iota(jnp.int32, sq.shape, 0)
            sq = jnp.where(row_ids < valid_rows, sq, 0.0)

        # Leading-axis sum = per-lane VPU adds only (no cross-lane XLU, no
        # serial scalar carry).  Groups of 8 rows match the native f32 (8,128)
        # tiling, so the reshape is a layout no-op.
        out_ref[...] += sq.reshape(-1, SUBLANES, LANES).sum(axis=0)[None]

    return kernel


def loss_base_forward(pred: jax.Array, target: jax.Array) -> jax.Array:
    """Pallas equivalent of Loss_Base.forward(pred, target) -> scalar loss."""
    assert pred is not None, "Input tensor pred can't be None!"
    assert target is not None, "Input tensor target can't be None!"
    assert pred.shape == target.shape, "pred/target shape mismatch"

    n_true = math.prod(pred.shape)
    assert n_true > 0, "empty input"

    flat_p = pred.reshape(-1)
    flat_t = target.reshape(-1)

    rows = n_true // LANES          # full 128-lane rows
    tail = n_true - rows * LANES    # <128-element remainder (handled in jnp)

    total = jnp.float32(0.0)

    if rows > 0:
        block_bytes, vmem_limit, max_chunks = _chip_config()
        itemsize = max(jnp.dtype(pred.dtype).itemsize, jnp.dtype(target.dtype).itemsize)
        packed = max(_packed_sublanes(pred.dtype), _packed_sublanes(target.dtype))

        target_rows = max(packed, block_bytes // (LANES * itemsize))
        tile_rows = min(_round_up(target_rows, packed), _round_up(rows, packed))

        num_tiles = pl.cdiv(rows, tile_rows)
        num_chunks = max_chunks if num_tiles >= max_chunks else 1
        inner = pl.cdiv(num_tiles, num_chunks)

        bulk = rows * LANES
        # Lane-aligned inputs (the common case): reshape of the original
        # buffer is a free bitcast -> zero extra HBM traffic.  A ragged tail
        # forces one slice copy of the bulk; the remainder is summed below.
        pred2d = (flat_p if tail == 0 else flat_p[:bulk]).reshape(rows, LANES)
        tgt2d = (flat_t if tail == 0 else flat_t[:bulk]).reshape(rows, LANES)

        # Mask only when the grid over-covers the true row extent.
        need_mask = (num_chunks * inner * tile_rows) != rows
        if num_chunks * inner > num_tiles:
            # Clamp so no block's DMA starts past the array (its contribution
            # is masked out anyway since the mask uses the logical block idx).
            last_tile = num_tiles - 1
            in_map = lambda g, i: (jnp.minimum(g * inner + i, last_tile), 0)
        else:
            in_map = lambda g, i: (g * inner + i, 0)

        cost = pl.CostEstimate(
            flops=3 * rows * LANES,          # sub + mul + add per element
            transcendentals=0,
            bytes_accessed=rows * LANES * (pred2d.dtype.itemsize + tgt2d.dtype.itemsize)
            + num_chunks * SUBLANES * LANES * 4,
        )

        kernel = _make_kernel(tile_rows, inner, rows, need_mask)

        partials = pl.pallas_call(
            kernel,
            out_shape=jax.ShapeDtypeStruct((num_chunks, SUBLANES, LANES), jnp.float32),
            grid_spec=pltpu.PrefetchScalarGridSpec(
                num_scalar_prefetch=0,
                grid=(num_chunks, inner),
                in_specs=[
                    pl.BlockSpec((tile_rows, LANES), in_map),
                    pl.BlockSpec((tile_rows, LANES), in_map),
                ],
                out_specs=pl.BlockSpec((1, SUBLANES, LANES), lambda g, i: (g, 0, 0)),
            ),
            compiler_params=pltpu.CompilerParams(
                dimension_semantics=("parallel", "arbitrary"),
                vmem_limit_bytes=vmem_limit,
            ),
            cost_estimate=cost,
        )(pred2d, tgt2d)

        total = total + jnp.sum(partials)

    if tail:
        dp = flat_p[rows * LANES:].astype(jnp.float32) - flat_t[rows * LANES:].astype(jnp.float32)
        total = total + jnp.sum(dp * dp)

    # Divide by the TRUE element count (never a padded one).
    return total / jnp.float32(n_true)


class LossBase:
    """Interface mirror of the PyTorch Loss_Base module."""

    def __init__(self, name: str = "Loss_Base"):
        self.name = name

    def __repr__(self) -> str:
        return self.name

    def forward(self, pred=None, target=None):
        assert pred is not None, "Input tensor pred can't be None!"
        assert target is not None, "Input tensor target can't be None!"
        # TODO(synk): abstract in the original; concrete MSE stand-in here.
        return loss_base_forward(pred, target)

    __call__ = forward


if __name__ == "__main__":
    key = jax.random.PRNGKey(0)
    k_pred, k_tgt = jax.random.split(key)

    # NCHW, matching PyTorch conv-style layout: batch=2, channels=4, 16x16.
    x_shape = (2, 4, 16, 16)
    pred = jax.random.normal(k_pred, x_shape, dtype=jnp.float32)
    target = jax.random.normal(k_tgt, x_shape, dtype=jnp.float32)

    loss = loss_base_forward(pred, target)
    jax.block_until_ready(loss)
    ref = jnp.mean((pred - target) ** 2)
    assert jnp.allclose(loss, ref, rtol=1e-5, atol=1e-5), (loss, ref)

    # Ragged shape: exercises the partial-block mask + <128-element tail path.
    y_shape = (2, 3, 13, 17)   # 1326 elements -> 10 full rows + 46 tail
    pred2 = jax.random.normal(k_pred, y_shape, dtype=jnp.float32)
    target2 = jax.random.normal(k_tgt, y_shape, dtype=jnp.float32)
    loss2 = loss_base_forward(pred2, target2)
    jax.block_until_ready(loss2)
    ref2 = jnp.mean((pred2 - target2) ** 2)
    assert jnp.allclose(loss2, ref2, rtol=1e-5, atol=1e-5), (loss2, ref2)

    # bf16 inputs: exercises the packed-sublane (16-row) tiling path.
    pred3 = pred.astype(jnp.bfloat16)
    target3 = target.astype(jnp.bfloat16)
    loss3 = loss_base_forward(pred3, target3)
    jax.block_until_ready(loss3)
    ref3 = jnp.mean((pred3.astype(jnp.float32) - target3.astype(jnp.float32)) ** 2)
    assert jnp.allclose(loss3, ref3, rtol=1e-5, atol=1e-5), (loss3, ref3)

    print("KERNEL_OK")
</pallas_src>

<mosaic_0001>
module attributes {stable_mosaic.version = 11 : i64} {
  func.func @kernel(%arg0: i32, %arg1: i32, %arg2: memref<16x128xf32, #tpu.memory_space<vmem>>, %arg3: memref<16x128xf32, #tpu.memory_space<vmem>>, %arg4: memref<1x8x128xf32, #tpu.memory_space<vmem>>) attributes {dimension_semantics = [#tpu.dimension_semantics<parallel>, #tpu.dimension_semantics<arbitrary>], iteration_bounds = array<i64: 1, 1>, scalar_prefetch = 0 : i64, scratch_operands = 0 : i64, tpu.core_type = #tpu.core_type<tc>, window_params = [{transform_indices = @transform_0, window_bounds = array<i64: 16, 128>}, {transform_indices = @transform_1, window_bounds = array<i64: 16, 128>}, {transform_indices = @transform_2, window_bounds = array<i64: 1, 8, 128>}]} {
    %c0_i32 = arith.constant 0 : i32
    %0 = arith.cmpi eq, %arg1, %c0_i32 : i32
    %1 = arith.extui %0 : i1 to i32
    %c0_i32_0 = arith.constant 0 : i32
    %2 = arith.cmpi ne, %1, %c0_i32_0 : i32
    scf.if %2 {
      %cst_10 = arith.constant 0.000000e+00 : f32
      %13 = vector.broadcast %cst_10 : f32 to vector<1x8x128xf32>
      %c0_11 = arith.constant 0 : index
      %c0_12 = arith.constant 0 : index
      %c0_13 = arith.constant 0 : index
      %14 = vector.load %arg4[%c0_11, %c0_12, %c0_13] : memref<1x8x128xf32, #tpu.memory_space<vmem>>, vector<1x8x128xf32>
      tpu.vector_store %arg4[%c0_11, %c0_12, %c0_13], %13 {strides = array<i32>} : memref<1x8x128xf32, #tpu.memory_space<vmem>>, vector<1x8x128xf32>,
    } else {
    }
    %c0 = arith.constant 0 : index
    %c0_1 = arith.constant 0 : index
    %3 = vector.load %arg2[%c0, %c0_1] : memref<16x128xf32, #tpu.memory_space<vmem>>, vector<16x128xf32>
    %c0_2 = arith.constant 0 : index
    %c0_3 = arith.constant 0 : index
    %4 = vector.load %arg3[%c0_2, %c0_3] : memref<16x128xf32, #tpu.memory_space<vmem>>, vector<16x128xf32>
    %5 = arith.subf %3, %4 : vector<16x128xf32>
    %6 = arith.mulf %5, %5 : vector<16x128xf32>
    %c0_4 = arith.constant 0 : index
    %c0_5 = arith.constant 0 : index
    %c0_6 = arith.constant 0 : index
    %7 = vector.load %arg4[%c0_4, %c0_5, %c0_6] : memref<1x8x128xf32, #tpu.memory_space<vmem>>, vector<1x8x128xf32>
    %8 = vector.shape_cast %6 : vector<16x128xf32> to vector<2x8x128xf32>
    %cst = arith.constant dense<0.000000e+00> : vector<8x128xf32>
    %9 = vector.multi_reduction <add>, %8, %cst [0] : vector<2x8x128xf32> to vector<8x128xf32>
    %10 = vector.shape_cast %9 : vector<8x128xf32> to vector<1x8x128xf32>
    %11 = arith.addf %7, %10 : vector<1x8x128xf32>
    %c0_7 = arith.constant 0 : index
    %c0_8 = arith.constant 0 : index
    %c0_9 = arith.constant 0 : index
    %12 = vector.load %arg4[%c0_7, %c0_8, %c0_9] : memref<1x8x128xf32, #tpu.memory_space<vmem>>, vector<1x8x128xf32>
    tpu.vector_store %arg4[%c0_7, %c0_8, %c0_9], %11 {strides = array<i32>} : memref<1x8x128xf32, #tpu.memory_space<vmem>>, vector<1x8x128xf32>,
    return
  }
  func.func @transform_0(%arg0: i32, %arg1: i32) -> (i32, i32) {
    %c1_i32 = arith.constant 1 : i32
    %0 = arith.muli %arg0, %c1_i32 : i32
    %1 = arith.addi %0, %arg1 : i32
    %c0_i32 = arith.constant 0 : i32
    %c0_i32_0 = arith.constant 0 : i32
    return %1, %c0_i32 : i32, i32
  }
  func.func @transform_1(%arg0: i32, %arg1: i32) -> (i32, i32) {
    %c1_i32 = arith.constant 1 : i32
    %0 = arith.muli %arg0, %c1_i32 : i32
    %1 = arith.addi %0, %arg1 : i32
    %c0_i32 = arith.constant 0 : i32
    %c0_i32_0 = arith.constant 0 : i32
    return %1, %c0_i32 : i32, i32
  }
  func.func @transform_2(%arg0: i32, %arg1: i32) -> (i32, i32, i32) {
    %c0_i32 = arith.constant 0 : i32
    %c0_i32_0 = arith.constant 0 : i32
    %c0_i32_1 = arith.constant 0 : i32
    return %arg0, %c0_i32, %c0_i32_0 : i32, i32, i32
  }
}

</mosaic_0001>

<llo_original>
// kernel: tpu_custom_call.1
$region0: #{tpu_custom_call.1}
  #allocation0 [shape = 'u32[]', space=smem, size = 0x4, offset = 0x4, fixed_abs, tag = 'smem constant byte address 0x4 - core index']
  #allocation1 [shape = 'u32[72,128]{1,0:T(1,128)}', space=vmem, size = 0x9000, scoped, tag = 'internal scratch']
  %s0 = inlined_call_operand.hbm [shape: f32[16,128], index: 0, kind: input, shape index: {}]
  %s1 = inlined_call_operand.hbm [shape: f32[16,128], index: 1, kind: input, shape index: {}]
  %s2 = inlined_call_operand.hbm [shape: f32[1,8,128], index: 2, kind: output, shape index: {}]
  %s3 = sld [smem:[#allocation0]]
  $region30: #{tpu_custom_call.1} parent=0
    _
  %s5 = ssub.s32 1, %s3
  %s6 = scalar_select 0, %s5, %s3
  $region1: #{tpu_custom_call.1} parent=0
    #allocation2 [shape = 'u8[8192]{0}', space=vmem, size = 0x2000, scoped, tag = 'input window, operand 0, single buffered']
    #allocation3 [shape = 's32[1]{0}', space=sflag, size = 0x4, scoped, tag = 'scoped memory for tpu_custom_call.1']
    #allocation4 [shape = 's32[1]{0}', space=sflag, size = 0x4, scoped, tag = 'scoped memory for tpu_custom_call.1']
    #allocation5 [shape = 'u8[8192]{0}', space=vmem, size = 0x2000, scoped, tag = 'input window, operand 1, single buffered']
    #allocation6 [shape = 's32[1]{0}', space=sflag, size = 0x4, scoped, tag = 'scoped memory for tpu_custom_call.1']
    #allocation7 [shape = 'u8[4096]{0}', space=vmem, size = 0x1000, scoped, tag = 'output window, operand 0, single buffered']
    %7 = vsyncpa [#allocation3], 0
    %8 = vsyncpa [#allocation6], 0
    %9 = vsyncpa [#allocation4], 0
    // Predicated region
    $region2: #{tpu_custom_call.1} parent=1 // pred_check
      _
    $region3: #{tpu_custom_call.1} parent=1 // pred_check_branch
      %11 = sbr.rel (0) target = $region5
    $region4: #{tpu_custom_call.1} parent=1 // pred_region
      %s12 = sadd.s32 0, 0
      %s13 = smul.u32 2, %s12
      %15 = vsyncadd [#allocation3], 0
      %s16 = smul.addr %s13, 8
      %s17 = scalar_lea.hbm %s0, %s16
      %s18 = sshll.u32 %s17, 4
      %s19 = int_to_ptr.hbm [resolvable:$true] %s18
      %s20 = sshll.u32 [#allocation2], 4
      %s21 = int_to_ptr.vmem [resolvable:$true] %s20
      %26 = dma.hbm_to_vmem [thread:$0]  %s19, 256, %s21, [#allocation3], 128, 128, 8
    $region5: #{tpu_custom_call.1} parent=1 // pred_fallthru
      _
    // Predicated region
    $region6: #{tpu_custom_call.1} parent=1 // pred_check
      _
    $region7: #{tpu_custom_call.1} parent=1 // pred_check_branch
      %28 = sbr.rel (0) target = $region9
    $region8: #{tpu_custom_call.1} parent=1 // pred_region
      %s29 = sadd.s32 0, 0
      %s30 = smul.u32 2, %s29
      %32 = vsyncadd [#allocation6], 0
      %s33 = smul.addr %s30, 8
      %s34 = scalar_lea.hbm %s1, %s33
      %s35 = sshll.u32 %s34, 4
      %s36 = int_to_ptr.hbm [resolvable:$true] %s35
      %s37 = sshll.u32 [#allocation5], 4
      %s38 = int_to_ptr.vmem [resolvable:$true] %s37
      %43 = dma.hbm_to_vmem [thread:$0]  %s36, 256, %s38, [#allocation6], 128, 128, 8
    $region9: #{tpu_custom_call.1} parent=1 // pred_fallthru
      _
    // Predicated region
    $region10: #{tpu_custom_call.1} parent=1 // pred_check
      _
    $region11: #{tpu_custom_call.1} parent=1 // pred_check_branch
      %45 = sbr.rel (0) target = $region13
    $region12: #{tpu_custom_call.1} parent=1 // pred_region
      %47 = dma.done [#allocation3], 256
    $region13: #{tpu_custom_call.1} parent=1 // pred_fallthru
      _
    // Predicated region
    $region14: #{tpu_custom_call.1} parent=1 // pred_check
      _
    $region15: #{tpu_custom_call.1} parent=1 // pred_check_branch
      %49 = sbr.rel (0) target = $region17
    $region16: #{tpu_custom_call.1} parent=1 // pred_region
      %51 = dma.done [#allocation6], 256
    $region17: #{tpu_custom_call.1} parent=1 // pred_fallthru
      _
    %s52 = sadd.s32 0, 0
    %s53 = smul.u32 2, %s52
    %s54 = sadd.s32 0, 0
    %s55 = smul.u32 2, %s54
    %p56 = scmp.eq.s32.totalorder 0, 0
    // Predicated region
    $region18: #{tpu_custom_call.1} parent=1 // pred_check
      %p57 = pneg %p56
    $region19: #{tpu_custom_call.1} parent=1 // pred_check_branch
      %59 = sbr.rel (%p57) target = $region21
    $region20: #{tpu_custom_call.1} parent=1 // pred_region
      %60 = vst [vmem:[#allocation7] sm:$0xff] 0.0
    $region21: #{tpu_custom_call.1} parent=1 // pred_fallthru
      _
    %v61 = vld [vmem:[#allocation2] sm:$0xff]
    %v62 = vld [vmem:[#allocation2 + $0x8] sm:$0xff]
    %v63 = vld [vmem:[#allocation5] sm:$0xff]
    %v64 = vld [vmem:[#allocation5 + $0x8] sm:$0xff]
    %v65 = vsub.f32 %v61, %v63
    %v66 = vsub.f32 %v62, %v64
    %v67 = vmul.f32 %v65, %v65
    %v68 = vmul.f32 %v66, %v66
    %v69 = vld [vmem:[#allocation7] sm:$0xff]
    %v70 = vadd.f32 %v67, %v68
    %v71 = vadd.f32 %v69, %v70
    %72 = vst [vmem:[#allocation7] sm:$0xff] %v71
    // Predicated region
    $region22: #{tpu_custom_call.1} parent=1 // pred_check
      _
    $region23: #{tpu_custom_call.1} parent=1 // pred_check_branch
      %74 = sbr.rel (0) target = $region25
    $region24: #{tpu_custom_call.1} parent=1 // pred_region
      %76 = vsyncadd [#allocation4], 0
      %s78 = sshll.u32 [#allocation7], 4
      %s79 = int_to_ptr.vmem [resolvable:$true] %s78
      %s80 = sshll.u32 %s2, 4
      %s81 = int_to_ptr.hbm [resolvable:$true] %s80
      %83 = dma.vmem_to_hbm [thread:$0]  %s79, 128, %s81, [#allocation4]
    $region25: #{tpu_custom_call.1} parent=1 // pred_fallthru
      _
    // Predicated region
    $region26: #{tpu_custom_call.1} parent=1 // pred_check
      _
    $region27: #{tpu_custom_call.1} parent=1 // pred_check_branch
      %85 = sbr.rel (0) target = $region29
    $region28: #{tpu_custom_call.1} parent=1 // pred_region
      %87 = dma.done [#allocation4], 128
    $region29: #{tpu_custom_call.1} parent=1 // pred_fallthru
      _
    %88 = vsyncpa [#allocation3], 1
    %89 = vsyncpa [#allocation6], 1
    %90 = vsyncpa [#allocation4], 1

</llo_original>
